<compile_context>
chip_gen: v7x
topology: tpu7x:2x2x1
jax: 0.10.0
libtpu: 0.0.40
codegen_flags: <defaults>
</compile_context>

<pallas_src>
import functools

import jax
import jax.numpy as jnp
from jax.experimental import pallas as pl
from jax.experimental.pallas import tpu as pltpu


def _round_up(x, m):
    return (x + m - 1) // m * m


# ----------------------------- fused Pallas kernel --------------------------

def _video_fused_kernel(patch_ref, conv_w_ref, conv_b_ref, proj_w_ref,
                        proj_b_ref, fc_w_ref, fc_b_ref, out_ref,
                        pool_acc, feat_acc, *, hw, tile_hw, nf):
    """grid = (bs, num_frames, hw_tiles); reduction over (num_frames, hw_tiles).

    pool_acc: (1, CCH_pad) f32 -- per-frame spatial sum of ReLU(conv)
    feat_acc: (1, FEAT)    f32 -- per-video sum of frame features
    """
    f = pl.program_id(1)
    t = pl.program_id(2)
    n_t = pl.num_programs(2)

    @pl.when(t == 0)
    def _():
        pool_acc[...] = jnp.zeros_like(pool_acc)

    @pl.when((f == 0) & (t == 0))
    def _():
        feat_acc[...] = jnp.zeros_like(feat_acc)

    # Conv as matmul over the im2col patch tile: (tile_hw, K_pad) @ (K_pad, CCH_pad).
    patches = patch_ref[0, 0]                                 # (tile_hw, K_pad) bf16
    conv = jnp.dot(patches, conv_w_ref[...], preferred_element_type=jnp.float32)
    conv = jnp.maximum(conv + conv_b_ref[...], 0.0)           # (tile_hw, CCH_pad) f32

    # Spatial sum as an MXU contraction with a masked ones-row; the mask also
    # zeroes any HW-padding rows (which would otherwise contribute ReLU(bias)).
    row_ids = t * tile_hw + jax.lax.broadcasted_iota(jnp.int32, (1, tile_hw), 1)
    ones_row = (row_ids < hw).astype(jnp.float32)             # (1, tile_hw)
    pool_acc[...] += jnp.dot(ones_row, conv, preferred_element_type=jnp.float32)

    # End of this frame's spatial loop: global-avg-pool -> proj + ReLU, then
    # accumulate the frame feature for the frame-mean.
    @pl.when(t == n_t - 1)
    def _():
        pooled = (pool_acc[...] * (1.0 / hw)).astype(proj_w_ref.dtype)   # (1, CCH_pad)
        feat = jnp.dot(pooled, proj_w_ref[...], preferred_element_type=jnp.float32)
        feat_acc[...] += jnp.maximum(feat + proj_b_ref[...], 0.0)        # (1, FEAT)

    # Last frame: frame-mean -> fc, single lane-dense store of the logits.
    @pl.when((t == n_t - 1) & (f == nf - 1))
    def _():
        mean_feat = (feat_acc[...] * (1.0 / nf)).astype(fc_w_ref.dtype)  # (1, FEAT)
        logits = jnp.dot(mean_feat, fc_w_ref[...], preferred_element_type=jnp.float32)
        out_ref[0] = (logits + fc_b_ref[...]).astype(out_ref.dtype)


# ------------------------------- JAX glue ----------------------------------

def _im2col_3x3_nhwc(x_nchw):
    """(N, C, H, W), padding=1 -> (N, H, W, 9*C) patches, (dh,dw)-major / c-minor."""
    n, c, h, w = x_nchw.shape
    x = jnp.transpose(x_nchw, (0, 2, 3, 1))                   # NHWC (C on the lane axis)
    xp = jnp.pad(x, ((0, 0), (1, 1), (1, 1), (0, 0)))
    cols = [xp[:, dh:dh + h, dw:dw + w, :] for dh in range(3) for dw in range(3)]
    return jnp.concatenate(cols, axis=-1)
    # TODO(synk): fold the 3x3 stencil into the Pallas kernel (9 shifted
    # accumulating matmuls over a halo'd VMEM tile) to avoid the 9x im2col
    # materialization in HBM entirely.


def init_params(key, c_in, conv_ch=16, feat=128, num_classes=10):
    k1, k2, k3 = jax.random.split(key, 3)
    return {
        # synthetic `base` backbone (stand-in for the external ResNet)
        "conv_w": jax.random.normal(k1, (conv_ch, c_in, 3, 3), jnp.float32) * 0.1,
        "conv_b": jnp.zeros((conv_ch,), jnp.float32),
        "proj_w": jax.random.normal(k2, (conv_ch, feat), jnp.float32) * 0.1,
        "proj_b": jnp.zeros((feat,), jnp.float32),
        # classifier head: matches torch init (normal std=0.01, zero bias)
        "fc_w": jax.random.normal(k3, (num_classes, feat), jnp.float32) * 0.01,
        "fc_b": jnp.zeros((num_classes,), jnp.float32),
    }


def prepare_params(params, num_classes, compute_dtype=jnp.bfloat16):
    """One-time: transpose / pad / cast weights into lane-dense MXU layout."""
    conv_w = params["conv_w"]
    conv_ch, c_in = conv_w.shape[0], conv_w.shape[1]
    feat = params["proj_w"].shape[1]

    k = c_in * 9
    k_pad = _round_up(k, 32)               # conv-matmul reduction dim (aligned, low HBM cost)
    cch_pad = _round_up(conv_ch, 128)      # conv channels -> full lane width
    nc_pad = _round_up(num_classes, 128)   # logits -> unmasked lane-dense store

    # (out, in, kh, kw) -> ((dh,dw) major, c minor, out) to match im2col order.
    w_mat = conv_w.transpose(2, 3, 1, 0).reshape(k, conv_ch)
    prep = {
        "conv_w_mat": jnp.pad(w_mat, ((0, k_pad - k), (0, cch_pad - conv_ch))
                              ).astype(compute_dtype),
        "conv_b": jnp.pad(params["conv_b"], (0, cch_pad - conv_ch)
                          ).reshape(1, cch_pad).astype(jnp.float32),
        "proj_w": jnp.pad(params["proj_w"], ((0, cch_pad - conv_ch), (0, 0))
                          ).astype(compute_dtype),
        "proj_b": params["proj_b"].reshape(1, feat).astype(jnp.float32),
        "fc_w": jnp.pad(params["fc_w"].T, ((0, 0), (0, nc_pad - num_classes))
                        ).astype(compute_dtype),
        "fc_b": jnp.pad(params["fc_b"], (0, nc_pad - num_classes)
                        ).reshape(1, nc_pad).astype(jnp.float32),
    }
    meta = dict(k=k, k_pad=k_pad, cch_pad=cch_pad, feat=feat,
                num_classes=num_classes, nc_pad=nc_pad,
                compute_dtype=compute_dtype)
    return prep, meta


def video_classifier_forward(prep, meta, x):
    """x: (bs, num_frames, C, H, W) -> logits (bs, num_classes)."""
    bs, nf, c, h, w = x.shape
    hw = h * w
    k, k_pad = meta["k"], meta["k_pad"]
    cch_pad, feat, nc_pad = meta["cch_pad"], meta["feat"], meta["nc_pad"]
    dtype = meta["compute_dtype"]

    # view(bs*num_frames, c, h, w) -> lane-dense im2col patch matrix.
    patches = _im2col_3x3_nhwc(x.reshape(bs * nf, c, h, w))   # (bs*nf, H, W, 9C)
    patches = patches.reshape(bs, nf, hw, k)

    # HW tiling = M-tiling of the conv matmul, pipelined over the grid.
    tile_hw = _round_up(hw, 8) if hw <= 512 else 512
    hw_pad = _round_up(hw, tile_hw)
    n_hw_tiles = hw_pad // tile_hw
    patches = jnp.pad(patches, ((0, 0), (0, 0), (0, hw_pad - hw), (0, k_pad - k)))
    patches = patches.astype(dtype)

    flops = (2 * bs * nf * hw_pad * k_pad * cch_pad           # conv matmul
             + 2 * bs * nf * hw_pad * cch_pad                 # pooling contraction
             + 2 * bs * nf * cch_pad * feat                   # projection
             + 2 * bs * feat * nc_pad)                        # fc
    bytes_accessed = (patches.size * patches.dtype.itemsize
                      + sum(prep[n].size * prep[n].dtype.itemsize for n in
                            ("conv_w_mat", "conv_b", "proj_w", "proj_b",
                             "fc_w", "fc_b"))
                      + bs * nc_pad * 4)

    out = pl.pallas_call(
        functools.partial(_video_fused_kernel, hw=hw, tile_hw=tile_hw, nf=nf),
        out_shape=jax.ShapeDtypeStruct((bs, 1, nc_pad), jnp.float32),
        grid_spec=pltpu.PrefetchScalarGridSpec(
            num_scalar_prefetch=0,
            grid=(bs, nf, n_hw_tiles),
            in_specs=[
                pl.BlockSpec((1, 1, tile_hw, k_pad), lambda b, f, t: (b, f, t, 0)),
                pl.BlockSpec((k_pad, cch_pad), lambda b, f, t: (0, 0)),
                pl.BlockSpec((1, cch_pad), lambda b, f, t: (0, 0)),
                pl.BlockSpec((cch_pad, feat), lambda b, f, t: (0, 0)),
                pl.BlockSpec((1, feat), lambda b, f, t: (0, 0)),
                pl.BlockSpec((feat, nc_pad), lambda b, f, t: (0, 0)),
                pl.BlockSpec((1, nc_pad), lambda b, f, t: (0, 0)),
            ],
            out_specs=pl.BlockSpec((1, 1, nc_pad), lambda b, f, t: (b, 0, 0)),
            scratch_shapes=[pltpu.VMEM((1, cch_pad), jnp.float32),
                            pltpu.VMEM((1, feat), jnp.float32)],
        ),
        compiler_params=pltpu.CompilerParams(
            dimension_semantics=("parallel", "arbitrary", "arbitrary"),
            vmem_limit_bytes=32 * 1024 * 1024),
        cost_estimate=pl.CostEstimate(flops=flops, transcendentals=0,
                                      bytes_accessed=bytes_accessed),
    )(patches, prep["conv_w_mat"], prep["conv_b"], prep["proj_w"],
      prep["proj_b"], prep["fc_w"], prep["fc_b"])

    return out[:, 0, :meta["num_classes"]]


# --------------------------- reference (pure JAX) ---------------------------

def _reference_forward(prep, meta, x):
    """Pure-JAX reference using the same padded weights & cast points."""
    bs, nf, c, h, w = x.shape
    hw = h * w
    dtype = meta["compute_dtype"]
    patches = _im2col_3x3_nhwc(x.reshape(bs * nf, c, h, w)).reshape(bs * nf, hw, meta["k"])
    patches = jnp.pad(patches, ((0, 0), (0, 0), (0, meta["k_pad"] - meta["k"])))
    patches = patches.astype(dtype).astype(jnp.float32)
    conv = jnp.einsum("nsk,kc->nsc", patches,
                      prep["conv_w_mat"].astype(jnp.float32))
    conv = jnp.maximum(conv + prep["conv_b"], 0.0)
    pooled = conv.mean(axis=1).astype(dtype).astype(jnp.float32)       # (bs*nf, cch_pad)
    feats = pooled @ prep["proj_w"].astype(jnp.float32)
    feats = jnp.maximum(feats + prep["proj_b"], 0.0)
    mean_feat = feats.reshape(bs, nf, -1).mean(axis=1)
    mean_feat = mean_feat.astype(dtype).astype(jnp.float32)
    logits = mean_feat @ prep["fc_w"].astype(jnp.float32) + prep["fc_b"]
    return logits[:, :meta["num_classes"]]


if __name__ == "__main__":
    key = jax.random.PRNGKey(0)
    kx, kp = jax.random.split(key)

    bs, nf, c, h, w = 2, 4, 3, 8, 8
    num_classes = 10

    x = jax.random.normal(kx, (bs, nf, c, h, w), jnp.float32)
    params = init_params(kp, c_in=c, num_classes=num_classes)
    prep, meta = prepare_params(params, num_classes)

    fwd = jax.jit(lambda prep_, x_: video_classifier_forward(prep_, meta, x_))
    logits = jax.block_until_ready(fwd(prep, x))

    assert logits.shape == (bs, num_classes), logits.shape
    ref = _reference_forward(prep, meta, x)
    assert jnp.allclose(logits, ref, atol=5e-4, rtol=5e-3), (
        float(jnp.max(jnp.abs(logits - ref))))

    print("KERNEL_OK")
</pallas_src>

<mosaic_0001>
module attributes {stable_mosaic.version = 11 : i64} {
  func.func @_video_fused_kernel(%arg0: i32, %arg1: i32, %arg2: i32, %arg3: memref<1x1x64x32xbf16, #tpu.memory_space<vmem>>, %arg4: memref<32x128xbf16, #tpu.memory_space<vmem>>, %arg5: memref<1x128xf32, #tpu.memory_space<vmem>>, %arg6: memref<128x128xbf16, #tpu.memory_space<vmem>>, %arg7: memref<1x128xf32, #tpu.memory_space<vmem>>, %arg8: memref<128x128xbf16, #tpu.memory_space<vmem>>, %arg9: memref<1x128xf32, #tpu.memory_space<vmem>>, %arg10: memref<1x1x128xf32, #tpu.memory_space<vmem>>, %arg11: memref<1x128xf32, #tpu.memory_space<vmem>>, %arg12: memref<1x128xf32, #tpu.memory_space<vmem>>) attributes {dimension_semantics = [#tpu.dimension_semantics<parallel>, #tpu.dimension_semantics<arbitrary>, #tpu.dimension_semantics<arbitrary>], iteration_bounds = array<i64: 2, 4, 1>, scalar_prefetch = 0 : i64, scratch_operands = 2 : i64, tpu.core_type = #tpu.core_type<tc>, window_params = [{transform_indices = @transform_0, window_bounds = array<i64: 1, 1, 64, 32>}, {pipeline_mode = #tpu.pipeline_mode<synchronous>, transform_indices = @transform_1, window_bounds = array<i64: 32, 128>}, {pipeline_mode = #tpu.pipeline_mode<synchronous>, transform_indices = @transform_2, window_bounds = array<i64: 1, 128>}, {pipeline_mode = #tpu.pipeline_mode<synchronous>, transform_indices = @transform_3, window_bounds = array<i64: 128, 128>}, {pipeline_mode = #tpu.pipeline_mode<synchronous>, transform_indices = @transform_4, window_bounds = array<i64: 1, 128>}, {pipeline_mode = #tpu.pipeline_mode<synchronous>, transform_indices = @transform_5, window_bounds = array<i64: 128, 128>}, {pipeline_mode = #tpu.pipeline_mode<synchronous>, transform_indices = @transform_6, window_bounds = array<i64: 1, 128>}, {transform_indices = @transform_7, window_bounds = array<i64: 1, 1, 128>}]} {
    %c0_i32 = arith.constant 0 : i32
    %0 = arith.cmpi eq, %arg2, %c0_i32 : i32
    %1 = arith.extui %0 : i1 to i32
    %c0_i32_0 = arith.constant 0 : i32
    %2 = arith.cmpi ne, %1, %c0_i32_0 : i32
    scf.if %2 {
      %cst_22 = arith.constant 0.000000e+00 : f32
      %37 = vector.broadcast %cst_22 : f32 to vector<1x128xf32>
      %c0_23 = arith.constant 0 : index
      %c0_24 = arith.constant 0 : index
      %38 = vector.load %arg11[%c0_23, %c0_24] : memref<1x128xf32, #tpu.memory_space<vmem>>, vector<1x128xf32>
      tpu.vector_store %arg11[%c0_23, %c0_24], %37 {strides = array<i32>} : memref<1x128xf32, #tpu.memory_space<vmem>>, vector<1x128xf32>,
    } else {
    }
    %c0_i32_1 = arith.constant 0 : i32
    %3 = arith.cmpi eq, %arg1, %c0_i32_1 : i32
    %c0_i32_2 = arith.constant 0 : i32
    %4 = arith.cmpi eq, %arg2, %c0_i32_2 : i32
    %5 = arith.andi %3, %4 : i1
    %6 = arith.extui %5 : i1 to i32
    %c0_i32_3 = arith.constant 0 : i32
    %7 = arith.cmpi ne, %6, %c0_i32_3 : i32
    scf.if %7 {
      %cst_22 = arith.constant 0.000000e+00 : f32
      %37 = vector.broadcast %cst_22 : f32 to vector<1x128xf32>
      %c0_23 = arith.constant 0 : index
      %c0_24 = arith.constant 0 : index
      %38 = vector.load %arg12[%c0_23, %c0_24] : memref<1x128xf32, #tpu.memory_space<vmem>>, vector<1x128xf32>
      tpu.vector_store %arg12[%c0_23, %c0_24], %37 {strides = array<i32>} : memref<1x128xf32, #tpu.memory_space<vmem>>, vector<1x128xf32>,
    } else {
    }
    %c0 = arith.constant 0 : index
    %c0_4 = arith.constant 0 : index
    %c0_5 = arith.constant 0 : index
    %c0_6 = arith.constant 0 : index
    %8 = vector.load %arg3[%c0, %c0_4, %c0_5, %c0_6] : memref<1x1x64x32xbf16, #tpu.memory_space<vmem>>, vector<1x1x64x32xbf16>
    %9 = vector.shape_cast %8 : vector<1x1x64x32xbf16> to vector<64x32xbf16>
    %c0_7 = arith.constant 0 : index
    %c0_8 = arith.constant 0 : index
    %10 = vector.load %arg4[%c0_7, %c0_8] : memref<32x128xbf16, #tpu.memory_space<vmem>>, vector<32x128xbf16>
    %cst = arith.constant dense<0.000000e+00> : vector<64x128xf32>
    %11 = tpu.matmul %9, %10, %cst {dimension_numbers = #tpu.dot_dimension_numbers<[1], [0], [0], [1], [0, 0, 1, 1], [], []>} : vector<64x32xbf16>, vector<32x128xbf16>, vector<64x128xf32> -> vector<64x128xf32>
    %c0_9 = arith.constant 0 : index
    %c0_10 = arith.constant 0 : index
    %12 = vector.load %arg5[%c0_9, %c0_10] : memref<1x128xf32, #tpu.memory_space<vmem>>, vector<1x128xf32>
    %13 = vector.broadcast %12 : vector<1x128xf32> to vector<64x128xf32>
    %14 = arith.addf %11, %13 : vector<64x128xf32>
    %cst_11 = arith.constant 0.000000e+00 : f32
    %15 = vector.broadcast %cst_11 : f32 to vector<64x128xf32>
    %16 = arith.maximumf %14, %15 : vector<64x128xf32>
    %c64_i32 = arith.constant 64 : i32
    %17 = arith.muli %arg2, %c64_i32 : i32
    %18 = tpu.iota {dimensions = array<i32: 1>} : vector<1x64xi32>
    %19 = vector.broadcast %17 : i32 to vector<1x64xi32>
    %20 = arith.addi %19, %18 : vector<1x64xi32>
    %c64_i32_12 = arith.constant 64 : i32
    %21 = vector.broadcast %c64_i32_12 : i32 to vector<1x64xi32>
    %22 = arith.cmpi slt, %20, %21 : vector<1x64xi32>
    %23 = arith.extui %22 : vector<1x64xi1> to vector<1x64xi32>
    %24 = arith.sitofp %23 : vector<1x64xi32> to vector<1x64xf32>
    %c0_13 = arith.constant 0 : index
    %c0_14 = arith.constant 0 : index
    %25 = vector.load %arg11[%c0_13, %c0_14] : memref<1x128xf32, #tpu.memory_space<vmem>>, vector<1x128xf32>
    %cst_15 = arith.constant dense<0.000000e+00> : vector<1x128xf32>
    %26 = tpu.matmul %24, %16, %cst_15 {dimension_numbers = #tpu.dot_dimension_numbers<[1], [0], [0], [1], [0, 0, 1, 1], [], []>} : vector<1x64xf32>, vector<64x128xf32>, vector<1x128xf32> -> vector<1x128xf32>
    %27 = arith.addf %25, %26 : vector<1x128xf32>
    %c0_16 = arith.constant 0 : index
    %c0_17 = arith.constant 0 : index
    %28 = vector.load %arg11[%c0_16, %c0_17] : memref<1x128xf32, #tpu.memory_space<vmem>>, vector<1x128xf32>
    tpu.vector_store %arg11[%c0_16, %c0_17], %27 {strides = array<i32>} : memref<1x128xf32, #tpu.memory_space<vmem>>, vector<1x128xf32>,
    %c0_i32_18 = arith.constant 0 : i32
    %29 = arith.cmpi eq, %arg2, %c0_i32_18 : i32
    %30 = arith.extui %29 : i1 to i32
    %c0_i32_19 = arith.constant 0 : i32
    %31 = arith.cmpi ne, %30, %c0_i32_19 : i32
    scf.if %31 {
      %c0_22 = arith.constant 0 : index
      %c0_23 = arith.constant 0 : index
      %37 = vector.load %arg11[%c0_22, %c0_23] : memref<1x128xf32, #tpu.memory_space<vmem>>, vector<1x128xf32>
      %cst_24 = arith.constant 1.562500e-02 : f32
      %38 = vector.broadcast %cst_24 : f32 to vector<1x128xf32>
      %39 = arith.mulf %37, %38 : vector<1x128xf32>
      %40 = arith.truncf %39 : vector<1x128xf32> to vector<1x128xbf16>
      %c0_25 = arith.constant 0 : index
      %c0_26 = arith.constant 0 : index
      %41 = vector.load %arg6[%c0_25, %c0_26] : memref<128x128xbf16, #tpu.memory_space<vmem>>, vector<128x128xbf16>
      %cst_27 = arith.constant dense<0.000000e+00> : vector<1x128xf32>
      %42 = tpu.matmul %40, %41, %cst_27 {dimension_numbers = #tpu.dot_dimension_numbers<[1], [0], [0], [1], [0, 0, 1, 1], [], []>} : vector<1x128xbf16>, vector<128x128xbf16>, vector<1x128xf32> -> vector<1x128xf32>
      %c0_28 = arith.constant 0 : index
      %c0_29 = arith.constant 0 : index
      %43 = vector.load %arg12[%c0_28, %c0_29] : memref<1x128xf32, #tpu.memory_space<vmem>>, vector<1x128xf32>
      %c0_30 = arith.constant 0 : index
      %c0_31 = arith.constant 0 : index
      %44 = vector.load %arg7[%c0_30, %c0_31] : memref<1x128xf32, #tpu.memory_space<vmem>>, vector<1x128xf32>
      %45 = arith.addf %42, %44 : vector<1x128xf32>
      %cst_32 = arith.constant 0.000000e+00 : f32
      %46 = vector.broadcast %cst_32 : f32 to vector<1x128xf32>
      %47 = arith.maximumf %45, %46 : vector<1x128xf32>
      %48 = arith.addf %43, %47 : vector<1x128xf32>
      %c0_33 = arith.constant 0 : index
      %c0_34 = arith.constant 0 : index
      %49 = vector.load %arg12[%c0_33, %c0_34] : memref<1x128xf32, #tpu.memory_space<vmem>>, vector<1x128xf32>
      tpu.vector_store %arg12[%c0_33, %c0_34], %48 {strides = array<i32>} : memref<1x128xf32, #tpu.memory_space<vmem>>, vector<1x128xf32>,
    } else {
    }
    %c0_i32_20 = arith.constant 0 : i32
    %32 = arith.cmpi eq, %arg2, %c0_i32_20 : i32
    %c3_i32 = arith.constant 3 : i32
    %33 = arith.cmpi eq, %arg1, %c3_i32 : i32
    %34 = arith.andi %32, %33 : i1
    %35 = arith.extui %34 : i1 to i32
    %c0_i32_21 = arith.constant 0 : i32
    %36 = arith.cmpi ne, %35, %c0_i32_21 : i32
    scf.if %36 {
      %c0_22 = arith.constant 0 : index
      %c0_23 = arith.constant 0 : index
      %37 = vector.load %arg12[%c0_22, %c0_23] : memref<1x128xf32, #tpu.memory_space<vmem>>, vector<1x128xf32>
      %cst_24 = arith.constant 2.500000e-01 : f32
      %38 = vector.broadcast %cst_24 : f32 to vector<1x128xf32>
      %39 = arith.mulf %37, %38 : vector<1x128xf32>
      %40 = arith.truncf %39 : vector<1x128xf32> to vector<1x128xbf16>
      %c0_25 = arith.constant 0 : index
      %c0_26 = arith.constant 0 : index
      %41 = vector.load %arg8[%c0_25, %c0_26] : memref<128x128xbf16, #tpu.memory_space<vmem>>, vector<128x128xbf16>
      %cst_27 = arith.constant dense<0.000000e+00> : vector<1x128xf32>
      %42 = tpu.matmul %40, %41, %cst_27 {dimension_numbers = #tpu.dot_dimension_numbers<[1], [0], [0], [1], [0, 0, 1, 1], [], []>} : vector<1x128xbf16>, vector<128x128xbf16>, vector<1x128xf32> -> vector<1x128xf32>
      %c0_28 = arith.constant 0 : index
      %c0_29 = arith.constant 0 : index
      %43 = vector.load %arg9[%c0_28, %c0_29] : memref<1x128xf32, #tpu.memory_space<vmem>>, vector<1x128xf32>
      %44 = arith.addf %42, %43 : vector<1x128xf32>
      %c0_30 = arith.constant 0 : index
      %c0_31 = arith.constant 0 : index
      %c0_32 = arith.constant 0 : index
      %45 = vector.load %arg10[%c0_30, %c0_31, %c0_32] : memref<1x1x128xf32, #tpu.memory_space<vmem>>, vector<1x1x128xf32>
      %46 = vector.shape_cast %45 : vector<1x1x128xf32> to vector<1x128xf32>
      %47 = vector.shape_cast %44 : vector<1x128xf32> to vector<1x1x128xf32>
      tpu.vector_store %arg10[%c0_30, %c0_31, %c0_32], %47 {strides = array<i32>} : memref<1x1x128xf32, #tpu.memory_space<vmem>>, vector<1x1x128xf32>,
    } else {
    }
    return
  }
  func.func @transform_0(%arg0: i32, %arg1: i32, %arg2: i32) -> (i32, i32, i32, i32) {
    %c0_i32 = arith.constant 0 : i32
    %c0_i32_0 = arith.constant 0 : i32
    return %arg0, %arg1, %arg2, %c0_i32 : i32, i32, i32, i32
  }
  func.func @transform_1(%arg0: i32, %arg1: i32, %arg2: i32) -> (i32, i32) {
    %c0_i32 = arith.constant 0 : i32
    %c0_i32_0 = arith.constant 0 : i32
    %c0_i32_1 = arith.constant 0 : i32
    return %c0_i32, %c0_i32_0 : i32, i32
  }
  func.func @transform_2(%arg0: i32, %arg1: i32, %arg2: i32) -> (i32, i32) {
    %c0_i32 = arith.constant 0 : i32
    %c0_i32_0 = arith.constant 0 : i32
    %c0_i32_1 = arith.constant 0 : i32
    return %c0_i32, %c0_i32_0 : i32, i32
  }
  func.func @transform_3(%arg0: i32, %arg1: i32, %arg2: i32) -> (i32, i32) {
    %c0_i32 = arith.constant 0 : i32
    %c0_i32_0 = arith.constant 0 : i32
    %c0_i32_1 = arith.constant 0 : i32
    return %c0_i32, %c0_i32_0 : i32, i32
  }
  func.func @transform_4(%arg0: i32, %arg1: i32, %arg2: i32) -> (i32, i32) {
    %c0_i32 = arith.constant 0 : i32
    %c0_i32_0 = arith.constant 0 : i32
    %c0_i32_1 = arith.constant 0 : i32
    return %c0_i32, %c0_i32_0 : i32, i32
  }
  func.func @transform_5(%arg0: i32, %arg1: i32, %arg2: i32) -> (i32, i32) {
    %c0_i32 = arith.constant 0 : i32
    %c0_i32_0 = arith.constant 0 : i32
    %c0_i32_1 = arith.constant 0 : i32
    return %c0_i32, %c0_i32_0 : i32, i32
  }
  func.func @transform_6(%arg0: i32, %arg1: i32, %arg2: i32) -> (i32, i32) {
    %c0_i32 = arith.constant 0 : i32
    %c0_i32_0 = arith.constant 0 : i32
    %c0_i32_1 = arith.constant 0 : i32
    return %c0_i32, %c0_i32_0 : i32, i32
  }
  func.func @transform_7(%arg0: i32, %arg1: i32, %arg2: i32) -> (i32, i32, i32) {
    %c0_i32 = arith.constant 0 : i32
    %c0_i32_0 = arith.constant 0 : i32
    %c0_i32_1 = arith.constant 0 : i32
    return %arg0, %c0_i32, %c0_i32_0 : i32, i32, i32
  }
}

</mosaic_0001>

<llo_original>
// kernel: _lambda_.1
$region0: #{_lambda_.1}
  #allocation0 [shape = 'u32[]', space=smem, size = 0x4, offset = 0x4, fixed_abs, tag = 'smem constant byte address 0x4 - core index']
  #allocation1 [shape = 'u32[144,128]{1,0:T(1,128)}', space=vmem, size = 0x12000, scoped, tag = 'internal scratch']
  #allocation2 [shape = 'f32[1,128]{1,0:T(1,128)}', space=vmem, size = 0x200, scoped, tag = 'scratch operand']
  #allocation3 [shape = 'f32[1,128]{1,0:T(1,128)}', space=vmem, size = 0x200, scoped, tag = 'scratch operand']
  %s0 = inlined_call_operand.vmem [shape: bf16[2,4,64,32], index: 0, kind: input, shape index: {}]
  %s1 = inlined_call_operand.vmem [shape: bf16[32,128], index: 1, kind: input, shape index: {}]
  %s2 = inlined_call_operand.vmem [shape: f32[1,128], index: 2, kind: input, shape index: {}]
  %s3 = inlined_call_operand.vmem [shape: bf16[128,128], index: 3, kind: input, shape index: {}]
  %s4 = inlined_call_operand.vmem [shape: f32[1,128], index: 4, kind: input, shape index: {}]
  %s5 = inlined_call_operand.vmem [shape: bf16[128,128], index: 5, kind: input, shape index: {}]
  %s6 = inlined_call_operand.vmem [shape: f32[1,128], index: 6, kind: input, shape index: {}]
  %s7 = inlined_call_operand.hbm [shape: f32[2,1,128], index: 7, kind: output, shape index: {}]
  %s8 = sld [smem:[#allocation0]]
  $region77: #{_lambda_.1} parent=0
    _
  %s10 = ssub.s32 1, %s8
  %s11 = scalar_select 0, %s10, %s8
  $region1: #{_lambda_.1} parent=0
    #allocation4 [shape = 'u8[1024]{0}', space=vmem, size = 0x400, scoped, tag = 'output window, operand 0']
    #allocation5 [shape = 's32[2]{0}', space=sflag, size = 0x8, scoped, tag = 'scoped memory for _lambda_.1']
    %12 = vsyncpa [#allocation5], 0
    %s13 = scalar_lea.sflag [#allocation5], 1
    %14 = vsyncpa %s13, 0
    loop: start=0, step=1, limit=10
    $region2: #{_lambda_.1} parent=1 // loop_pre_header
      _
    $region3: #{_lambda_.1} parent=1 // loop_header
      %s16 = sphi 0, %s20
      %p17 = scmp.ge.s32.totalorder %s16, 10
      %s23 = sphi 0, %s42
      %s24 = sphi 0, %s38
      %s25 = sphi 0, %s34
      %s26 = sphi 0, %s23
      %s27 = sphi 0, %s24
      %s28 = sphi 0, %s25
      %s29 = sphi 0, %s26
      %s30 = sphi 0, %s27
      %s31 = sphi 0, %s28
      %s49 = sphi 0, %s51
      %s52 = sphi 0, %s49
      %s53 = sphi 0, %s52
      %s69 = sphi 0, %s53
      %s73 = sphi 0, %s73
      %s75 = sphi 0, %s73
      %s76 = sphi 0, %s75
      %s90 = sphi 0, %s76
      %s94 = sphi 0, %s94
      %s96 = sphi 0, %s94
      %s97 = sphi 0, %s96
      %s111 = sphi 0, %s97
      %s115 = sphi 0, %s115
      %s117 = sphi 0, %s115
      %s118 = sphi 0, %s117
      %s132 = sphi 0, %s118
      %s136 = sphi 0, %s136
      %s138 = sphi 0, %s136
      %s139 = sphi 0, %s138
      %s153 = sphi 0, %s139
      %s157 = sphi 0, %s157
      %s159 = sphi 0, %s157
      %s160 = sphi 0, %s159
      %s174 = sphi 0, %s160
      %s178 = sphi 0, %s178
      %s180 = sphi 0, %s178
      %s181 = sphi 0, %s180
      %s195 = sphi 0, %s181
      %s201 = sphi 0, %s203
      %s204 = sphi 0, %s201
      %s205 = sphi 0, %s204
      %s221 = sphi 0, %s205
    $region4: #{_lambda_.1} parent=1 // loop_header_branch
      %19 = sbr.rel (%p17) target = $region8
    $region5: #{_lambda_.1} parent=1 // loop_body
      %s21 = ssub.s32 %s16, 1
      %s22 = ssub.s32 %s16, 2
      %s32 = sadd.s32 1, %s25
      %p33 = scmp.ge.s32.totalorder %s32, 1
      %s34 = scalar_select %p33, 0, %s32
      %s35 = sadd.s32 1, %s24
      %s36 = scalar_select %p33, %s35, %s24
      %p37 = scmp.ge.s32.totalorder %s36, 4
      %s38 = scalar_select %p37, 0, %s36
      %s39 = sadd.s32 1, %s23
      %s40 = scalar_select %p37, %s39, %s23
      %p41 = scmp.ge.s32.totalorder %s40, 2
      %s42 = scalar_select %p41, 0, %s40
      %s43 = ssub.s32 %s23, %s42
      %s44 = ssub.s32 %s24, %s38
      %s45 = sor.u32 %s43, %s44
      %s46 = ssub.s32 %s25, %s34
      %s47 = sor.u32 %s45, %s46
      %p48 = scmp.eq.s32.totalorder %s47, 0
      %s50 = sadd.s32 %s49, 1
      %s51 = scalar_select %p48, %s49, %s50
      %p54 = pneg %p48
      %p55 = scmp.eq.s32.totalorder %s16, 7
      %p56 = por %p54, %p55
      %p57 = scmp.ne.s32.totalorder %s49, %s52
      %p58 = scmp.eq.s32.totalorder %s16, 0
      %p59 = por %p57, %p58
      %p60 = scmp.ne.s32.totalorder %s49, %s52
      %p61 = scmp.eq.s32.totalorder %s21, 7
      %p62 = por %p60, %p61
      %p63 = scmp.ne.s32.totalorder %s52, %s53
      %p64 = scmp.eq.s32.totalorder %s21, 0
      %p65 = por %p63, %p64
      %p66 = scmp.ne.s32.totalorder %s52, %s53
      %p67 = scmp.eq.s32.totalorder %s22, 7
      %p68 = por %p66, %p67
      %p70 = scmp.ne.s32.totalorder %s53, %s69
      %p71 = scmp.eq.s32.totalorder %s22, 0
      %p72 = por %p70, %p71
      %s74 = sadd.s32 %s73, 1
      %p77 = scmp.eq.s32.totalorder %s16, 7
      %p78 = scmp.ne.s32.totalorder %s73, %s75
      %p79 = scmp.eq.s32.totalorder %s16, 0
      %p80 = por %p78, %p79
      %p81 = scmp.ne.s32.totalorder %s73, %s75
      %p82 = scmp.eq.s32.totalorder %s21, 7
      %p83 = por %p81, %p82
      %p84 = scmp.ne.s32.totalorder %s75, %s76
      %p85 = scmp.eq.s32.totalorder %s21, 0
      %p86 = por %p84, %p85
      %p87 = scmp.ne.s32.totalorder %s75, %s76
      %p88 = scmp.eq.s32.totalorder %s22, 7
      %p89 = por %p87, %p88
      %p91 = scmp.ne.s32.totalorder %s76, %s90
      %p92 = scmp.eq.s32.totalorder %s22, 0
      %p93 = por %p91, %p92
      %s95 = sadd.s32 %s94, 1
      %p98 = scmp.eq.s32.totalorder %s16, 7
      %p99 = scmp.ne.s32.totalorder %s94, %s96
      %p100 = scmp.eq.s32.totalorder %s16, 0
      %p101 = por %p99, %p100
      %p102 = scmp.ne.s32.totalorder %s94, %s96
      %p103 = scmp.eq.s32.totalorder %s21, 7
      %p104 = por %p102, %p103
      %p105 = scmp.ne.s32.totalorder %s96, %s97
      %p106 = scmp.eq.s32.totalorder %s21, 0
      %p107 = por %p105, %p106
      %p108 = scmp.ne.s32.totalorder %s96, %s97
      %p109 = scmp.eq.s32.totalorder %s22, 7
      %p110 = por %p108, %p109
      %p112 = scmp.ne.s32.totalorder %s97, %s111
      %p113 = scmp.eq.s32.totalorder %s22, 0
      %p114 = por %p112, %p113
      %s116 = sadd.s32 %s115, 1
      %p119 = scmp.eq.s32.totalorder %s16, 7
      %p120 = scmp.ne.s32.totalorder %s115, %s117
      %p121 = scmp.eq.s32.totalorder %s16, 0
      %p122 = por %p120, %p121
      %p123 = scmp.ne.s32.totalorder %s115, %s117
      %p124 = scmp.eq.s32.totalorder %s21, 7
      %p125 = por %p123, %p124
      %p126 = scmp.ne.s32.totalorder %s117, %s118
      %p127 = scmp.eq.s32.totalorder %s21, 0
      %p128 = por %p126, %p127
      %p129 = scmp.ne.s32.totalorder %s117, %s118
      %p130 = scmp.eq.s32.totalorder %s22, 7
      %p131 = por %p129, %p130
      %p133 = scmp.ne.s32.totalorder %s118, %s132
      %p134 = scmp.eq.s32.totalorder %s22, 0
      %p135 = por %p133, %p134
      %s137 = sadd.s32 %s136, 1
      %p140 = scmp.eq.s32.totalorder %s16, 7
      %p141 = scmp.ne.s32.totalorder %s136, %s138
      %p142 = scmp.eq.s32.totalorder %s16, 0
      %p143 = por %p141, %p142
      %p144 = scmp.ne.s32.totalorder %s136, %s138
      %p145 = scmp.eq.s32.totalorder %s21, 7
      %p146 = por %p144, %p145
      %p147 = scmp.ne.s32.totalorder %s138, %s139
      %p148 = scmp.eq.s32.totalorder %s21, 0
      %p149 = por %p147, %p148
      %p150 = scmp.ne.s32.totalorder %s138, %s139
      %p151 = scmp.eq.s32.totalorder %s22, 7
      %p152 = por %p150, %p151
      %p154 = scmp.ne.s32.totalorder %s139, %s153
      %p155 = scmp.eq.s32.totalorder %s22, 0
      %p156 = por %p154, %p155
      %s158 = sadd.s32 %s157, 1
      %p161 = scmp.eq.s32.totalorder %s16, 7
      %p162 = scmp.ne.s32.totalorder %s157, %s159
      %p163 = scmp.eq.s32.totalorder %s16, 0
      %p164 = por %p162, %p163
      %p165 = scmp.ne.s32.totalorder %s157, %s159
      %p166 = scmp.eq.s32.totalorder %s21, 7
      %p167 = por %p165, %p166
      %p168 = scmp.ne.s32.totalorder %s159, %s160
      %p169 = scmp.eq.s32.totalorder %s21, 0
      %p170 = por %p168, %p169
      %p171 = scmp.ne.s32.totalorder %s159, %s160
      %p172 = scmp.eq.s32.totalorder %s22, 7
      %p173 = por %p171, %p172
      %p175 = scmp.ne.s32.totalorder %s160, %s174
      %p176 = scmp.eq.s32.totalorder %s22, 0
      %p177 = por %p175, %p176
      %s179 = sadd.s32 %s178, 1
      %p182 = scmp.eq.s32.totalorder %s16, 7
      %p183 = scmp.ne.s32.totalorder %s178, %s180
      %p184 = scmp.eq.s32.totalorder %s16, 0
      %p185 = por %p183, %p184
      %p186 = scmp.ne.s32.totalorder %s178, %s180
      %p187 = scmp.eq.s32.totalorder %s21, 7
      %p188 = por %p186, %p187
      %p189 = scmp.ne.s32.totalorder %s180, %s181
      %p190 = scmp.eq.s32.totalorder %s21, 0
      %p191 = por %p189, %p190
      %p192 = scmp.ne.s32.totalorder %s180, %s181
      %p193 = scmp.eq.s32.totalorder %s22, 7
      %p194 = por %p192, %p193
      %p196 = scmp.ne.s32.totalorder %s181, %s195
      %p197 = scmp.eq.s32.totalorder %s22, 0
      %p198 = por %p196, %p197
      %s199 = ssub.s32 %s23, %s42
      %p200 = scmp.eq.s32.totalorder %s199, 0
      %s202 = sadd.s32 %s201, 1
      %s203 = scalar_select %p200, %s201, %s202
      %p206 = pneg %p200
      %p207 = scmp.eq.s32.totalorder %s16, 7
      %p208 = por %p206, %p207
      %p209 = scmp.ne.s32.totalorder %s201, %s204
      %p210 = scmp.eq.s32.totalorder %s16, 0
      %p211 = por %p209, %p210
      %p212 = scmp.ne.s32.totalorder %s201, %s204
      %p213 = scmp.eq.s32.totalorder %s21, 7
      %p214 = por %p212, %p213
      %p215 = scmp.ne.s32.totalorder %s204, %s205
      %p216 = scmp.eq.s32.totalorder %s21, 0
      %p217 = por %p215, %p216
      %p218 = scmp.ne.s32.totalorder %s204, %s205
      %p219 = scmp.eq.s32.totalorder %s22, 7
      %p220 = por %p218, %p219
      %p222 = scmp.ne.s32.totalorder %s205, %s221
      %p223 = scmp.eq.s32.totalorder %s22, 0
      %p224 = por %p222, %p223
      %p225 = scmp.le.s32.totalorder 1, %s16
      %p226 = scmp.lt.s32.totalorder %s16, 9
      %p227 = pnand %p225, %p226
      %p228 = pneg %p227
      // Predicated region
      $region9: #{_lambda_.1} parent=5 // pred_check
        _
      $region10: #{_lambda_.1} parent=5 // pred_check_branch
        %230 = sbr.rel (%p227) target = $region12
      $region11: #{_lambda_.1} parent=5 // pred_region
        %s231 = ssub.s32 %s16, 1
        // Predicated region
        $region13: #{_lambda_.1} parent=11 // pred_check
          %p232 = pneg %p86
        $region14: #{_lambda_.1} parent=11 // pred_check_branch
          %234 = sbr.rel (%p232) target = $region16
        $region15: #{_lambda_.1} parent=11 // pred_region
          _
        $region16: #{_lambda_.1} parent=11 // pred_fallthru
          _
        // Predicated region
        $region17: #{_lambda_.1} parent=11 // pred_check
          %p235 = pneg %p107
        $region18: #{_lambda_.1} parent=11 // pred_check_branch
          %237 = sbr.rel (%p235) target = $region20
        $region19: #{_lambda_.1} parent=11 // pred_region
          _
        $region20: #{_lambda_.1} parent=11 // pred_fallthru
          _
        // Predicated region
        $region21: #{_lambda_.1} parent=11 // pred_check
          %p238 = pneg %p128
        $region22: #{_lambda_.1} parent=11 // pred_check_branch
          %240 = sbr.rel (%p238) target = $region24
        $region23: #{_lambda_.1} parent=11 // pred_region
          _
        $region24: #{_lambda_.1} parent=11 // pred_fallthru
          _
        // Predicated region
        $region25: #{_lambda_.1} parent=11 // pred_check
          %p241 = pneg %p149
        $region26: #{_lambda_.1} parent=11 // pred_check_branch
          %243 = sbr.rel (%p241) target = $region28
        $region27: #{_lambda_.1} parent=11 // pred_region
          _
        $region28: #{_lambda_.1} parent=11 // pred_fallthru
          _
        // Predicated region
        $region29: #{_lambda_.1} parent=11 // pred_check
          %p244 = pneg %p170
        $region30: #{_lambda_.1} parent=11 // pred_check_branch
          %246 = sbr.rel (%p244) target = $region32
        $region31: #{_lambda_.1} parent=11 // pred_region
          _
        $region32: #{_lambda_.1} parent=11 // pred_fallthru
          _
        // Predicated region
        $region33: #{_lambda_.1} parent=11 // pred_check
          %p247 = pneg %p191
        $region34: #{_lambda_.1} parent=11 // pred_check_branch
          %249 = sbr.rel (%p247) target = $region36
        $region35: #{_lambda_.1} parent=11 // pred_region
          _
        $region36: #{_lambda_.1} parent=11 // pred_fallthru
          _
      $region12: #{_lambda_.1} parent=5 // pred_fallthru
        _
      %p250 = scmp.lt.s32.totalorder %s16, 8
      // Predicated region
      $region37: #{_lambda_.1} parent=5 // pred_check
        %p251 = pneg %p250
      $region38: #{_lambda_.1} parent=5 // pred_check_branch
        %253 = sbr.rel (%p251) target = $region40
      $region39: #{_lambda_.1} parent=5 // pred_region
        // Predicated region
        $region41: #{_lambda_.1} parent=39 // pred_check
          %p254 = pneg %p59
        $region42: #{_lambda_.1} parent=39 // pred_check_branch
          %256 = sbr.rel (%p254) target = $region44
        $region43: #{_lambda_.1} parent=39 // pred_region
          %s257 = smul.u32 8, %s25
          %p258 = scmp.lt.s32.totalorder %s23, 1
          %s259 = scalar_select %p258, %s23, 1
          %p260 = scmp.lt.s32.totalorder %s24, 3
          %s261 = scalar_select %p260, %s24, 3
          %p262 = scmp.lt.s32.totalorder %s257, 7
          %s263 = scalar_select %p262, %s257, 7
          %s264 = smul.addr %s261, 8
          %s265 = sadd.s32 %s263, %s264
          %s266 = smul.addr %s259, 32
          %s267 = sadd.s32 %s265, %s266
          %s268 = smul.addr %s267, 4
          %s269 = scalar_lea.vmem %s0, %s268
          %s270 = smul.u32 8, %s25
        $region44: #{_lambda_.1} parent=39 // pred_fallthru
          _
      $region40: #{_lambda_.1} parent=5 // pred_fallthru
        _
      %p271 = scmp.le.s32.totalorder 1, %s16
      %p272 = scmp.lt.s32.totalorder %s16, 9
      %p273 = pnand %p271, %p272
      %p274 = pneg %p273
      // Predicated region
      $region45: #{_lambda_.1} parent=5 // pred_check
        _
      $region46: #{_lambda_.1} parent=5 // pred_check_branch
        %276 = sbr.rel (%p273) target = $region48
      $region47: #{_lambda_.1} parent=5 // pred_region
        %s277 = ssub.s32 %s16, 1
        %s278 = smul.u32 8, %s28
        %p279 = scmp.lt.s32.totalorder %s26, 1
        %s280 = scalar_select %p279, %s26, 1
        %p281 = scmp.lt.s32.totalorder %s27, 3
        %s282 = scalar_select %p281, %s27, 3
        %p283 = scmp.lt.s32.totalorder %s278, 7
        %s284 = scalar_select %p283, %s278, 7
        %s285 = smul.addr %s282, 8
        %s286 = sadd.s32 %s284, %s285
        %s287 = smul.addr %s280, 32
        %s288 = sadd.s32 %s286, %s287
        %s289 = smul.addr %s288, 4
        %s290 = scalar_lea.vmem %s0, %s289
        %p291 = pneg %p65
        %p292 = pneg %p62
        %p293 = pneg %p86
        %p294 = pneg %p83
        %p295 = pneg %p107
        %p296 = pneg %p104
        %p297 = pneg %p128
        %p298 = pneg %p125
        %p299 = pneg %p149
        %p300 = pneg %p146
        %p301 = pneg %p170
        %p302 = pneg %p167
        %p303 = pneg %p191
        %p304 = pneg %p188
        %p305 = pneg %p217
        %p306 = pneg %p214
        %s307 = sand.u32 %s204, 1
        %s308 = scalar_lea.sflag [#allocation5], %s307
        %s309 = sand.u32 %s204, 1
        %s310 = scalar_lea.vmem [#allocation4], %s309
        %s311 = smul.u32 8, %s28
        %p312 = scmp.lt.s32.totalorder %s26, 1
        %s313 = scalar_select %p312, %s26, 1
        %p314 = scmp.lt.s32.totalorder %s27, 3
        %s315 = scalar_select %p314, %s27, 3
        %p316 = scmp.lt.s32.totalorder %s311, 7
        %s317 = scalar_select %p316, %s311, 7
        %s318 = smul.addr %s315, 8
        %s319 = sadd.s32 %s317, %s318
        %s320 = smul.addr %s313, 32
        %s321 = sadd.s32 %s319, %s320
        %s322 = smul.addr %s321, 4
        %s323 = scalar_lea.vmem %s0, %s322
        %s324 = smul.u32 8, %s28
        %p326 = scmp.eq.s32.totalorder %s28, 0
        // Predicated region
        $region49: #{_lambda_.1} parent=47 // pred_check
          %p327 = pneg %p326
        $region50: #{_lambda_.1} parent=47 // pred_check_branch
          %329 = sbr.rel (%p327) target = $region52
        $region51: #{_lambda_.1} parent=47 // pred_region
          %330 = vst [vmem:[#allocation2] sm:$0x1] 0.0
        $region52: #{_lambda_.1} parent=47 // pred_fallthru
          _
        %p331 = scmp.eq.s32.totalorder %s27, 0
        %p332 = pnand %p331, %p326
        %p333 = pneg %p332
        // Predicated region
        $region53: #{_lambda_.1} parent=47 // pred_check
          _
        $region54: #{_lambda_.1} parent=47 // pred_check_branch
          %335 = sbr.rel (%p332) target = $region56
        $region55: #{_lambda_.1} parent=47 // pred_region
          %336 = vst [vmem:[#allocation3] sm:$0x1] 0.0
        $region56: #{_lambda_.1} parent=47 // pred_fallthru
          _
        %v337 = vld [vmem:[%s323] sm:$0xf]
        %v338 = vld [vmem:[%s323 + $0x4] sm:$0xf]
        %v339 = vld [vmem:[%s323 + $0x8] sm:$0xf]
        %v340 = vld [vmem:[%s323 + $0xc] sm:$0xf]
        %v341 = vld [vmem:[%s323 + $0x10] sm:$0xf]
        %v342 = vld [vmem:[%s323 + $0x14] sm:$0xf]
        %v343 = vld [vmem:[%s323 + $0x18] sm:$0xf]
        %v344 = vld [vmem:[%s323 + $0x1c] sm:$0xf]
        %v345 = vld [vmem:[%s1] sm:$0xf]
        %v346 = vld [vmem:[%s1 + $0x4] sm:$0xf]
        %v347 = vld [vmem:[%s1 + $0x8] sm:$0xf]
        %v348 = vld [vmem:[%s1 + $0xc] sm:$0xf]
        %v349 = vld [vmem:[%s2] sm:$0x1]
        %v351 = vlaneseq
        %v352 = vshrl.u32 %v351, 7
        %v353 = vsub.s32 0, %v352
        %v354 = vrot.slane %v349, %v353
        %v364 = vunpack.c.l.b16 %v337
        %v365 = vunpack.c.l.b16 %v338
        %v366 = vunpack.c.l.b16 %v339
        %v367 = vunpack.c.l.b16 %v340
        %v368 = vunpack.c.l.b16 %v341
        %v369 = vunpack.c.l.b16 %v342
        %v370 = vunpack.c.l.b16 %v343
        %v371 = vunpack.c.l.b16 %v344
        %v372 = vpack.c.b16 %v365, %v364
        %v373 = vpack.c.b16 %v367, %v366
        %v374 = vpack.c.b16 %v369, %v368
        %v375 = vpack.c.b16 %v371, %v370
        %v380 = vunpack.c.l.b16 %v345
        %v381 = vunpack.c.l.b16 %v346
        %v382 = vunpack.c.l.b16 %v347
        %v383 = vunpack.c.l.b16 %v348
        %v384 = vpack.c.b16 %v381, %v380
        %v385 = vpack.c.b16 %v383, %v382
        %vm388 = vcmask 261120
        %v390 = vsel %vm388, %v372, 0
        %v393 = vsel %vm388, %v373, 0
        %v396 = vsel %vm388, %v374, 0
        %v399 = vsel %vm388, %v375, 0
        %401 = vmatprep.subr.bf16.mxu0 0
        %402 = vmatpush1.bf16.msra.mxu0 %v384
        %403 = vmatprep.subr.bf16.mxu0 0
        %404 = vmatpush1.bf16.msra.mxu0 %v385
        %405 = vmatprep.subr.bf16.mxu0 0
        %406 = vmatpush1.bf16.msra.mxu0 0
        %407 = vmatprep.subr.bf16.mxu0 0
        %408 = vmatpush1.bf16.msra.mxu0 0
        %409 = vmatprep.subr.bf16.mxu0 0
        %410 = vmatpush1.bf16.msra.mxu0 0
        %411 = vmatprep.subr.bf16.mxu0 0
        %412 = vmatpush1.bf16.msra.mxu0 0
        %413 = vmatprep.subr.bf16.mxu0 0
        %414 = vmatpush1.bf16.msra.mxu0 0
        %415 = vmatprep.subr.bf16.mxu0 0
        %416 = vmatpush1.bf16.msra.mxu0 0
        %417 = vmatprep.subr.bf16.mxu0 0
        %418 = vmatpush1.bf16.msra.mxu0 0
        %419 = vmatprep.subr.bf16.mxu0 0
        %420 = vmatpush1.bf16.msra.mxu0 0
        %421 = vmatprep.subr.bf16.mxu0 0
        %422 = vmatpush1.bf16.msra.mxu0 0
        %423 = vmatprep.subr.bf16.mxu0 0
        %424 = vmatpush1.bf16.msra.mxu0 0
        %425 = vmatprep.subr.bf16.mxu0 0
        %426 = vmatpush1.bf16.msra.mxu0 0
        %427 = vmatprep.subr.bf16.mxu0 0
        %428 = vmatpush1.bf16.msra.mxu0 0
        %429 = vmatprep.subr.bf16.mxu0 0
        %430 = vmatpush1.bf16.msra.mxu0 0
        %431 = vmatprep.subr.bf16.mxu0 0
        %432 = vmatpush1.bf16.msra.mxu0 0
        %433 = vmatprep.mubr.bf16.mxu0 0
        %434 = vmatmul.mubr.bf16.gmra.mrb[0].mxu0 %v390
        %v435 = vpop.f32.mrb[0].mxu0
        %v436 = vadd.f32 %v354, %v435
        %v437 = vpop.f32.mrb[0].mxu0
        %v438 = vpop.f32.mrb[0].mxu0
        %v439 = vadd.f32 %v354, %v438
        %v440 = vpop.f32.mrb[0].mxu0
        %441 = vmatprep.mubr.bf16.mxu0 0
        %442 = vmatmul.mubr.bf16.gmra.mrb[0].mxu0 %v393
        %v443 = vpop.f32.mrb[0].mxu0
        %v444 = vadd.f32 %v354, %v443
        %v445 = vpop.f32.mrb[0].mxu0
        %v446 = vpop.f32.mrb[0].mxu0
        %v447 = vadd.f32 %v354, %v446
        %v448 = vpop.f32.mrb[0].mxu0
        %449 = vmatprep.mubr.bf16.mxu0 0
        %450 = vmatmul.mubr.bf16.gmra.mrb[0].mxu0 %v396
        %v451 = vpop.f32.mrb[0].mxu0
        %v452 = vadd.f32 %v354, %v451
        %v453 = vpop.f32.mrb[0].mxu0
        %v454 = vpop.f32.mrb[0].mxu0
        %v455 = vadd.f32 %v354, %v454
        %v456 = vpop.f32.mrb[0].mxu0
        %457 = vmatprep.mubr.bf16.mxu0 0
        %458 = vmatmul.mubr.bf16.gmra.mrb[0].mxu0 %v399
        %v459 = vpop.f32.mrb[0].mxu0
        %v460 = vadd.f32 %v354, %v459
        %v461 = vpop.f32.mrb[0].mxu0
        %v462 = vpop.f32.mrb[0].mxu0
        %v463 = vadd.f32 %v354, %v462
        %v464 = vpop.f32.mrb[0].mxu0
        %465 = vdwg.mxu0
        %v466 = vmax.f32 %v436, 0.0
        %v467 = vmax.f32 %v439, 0.0
        %v468 = vmax.f32 %v444, 0.0
        %v469 = vmax.f32 %v447, 0.0
        %v470 = vmax.f32 %v452, 0.0
        %v471 = vmax.f32 %v455, 0.0
        %v472 = vmax.f32 %v460, 0.0
        %v473 = vmax.f32 %v463, 0.0
        %s474 = smul.u32 %s28, 64
        %v475 = vlaneseq
        %v476 = vand.u32 %v475, 127
        %v477 = vstv %s474
        %v478 = vadd.s32 %v477, %v476
        %vm479 = vcmp.lt.s32.totalorder %v478, 64
        %v480 = vsel %vm479, 1, 0
        %v481 = vcvt.s32.f32 %v480
        %v482 = vld [vmem:[#allocation2] sm:$0x1]
        %vm483 = vcmask 523264
        %v485 = vsel %vm483, %v481, 0
        %487 = vmatprep.subr.mxu0 0.0
        %488 = vmatpush1.msra.mxu0 %v466
        %489 = vmatprep.subr.mxu0 0.0
        %490 = vmatpush1.msra.mxu0 %v467
        %491 = vmatprep.subr.mxu0 0.0
        %492 = vmatpush1.msra.mxu0 %v468
        %493 = vmatprep.subr.mxu0 0.0
        %494 = vmatpush1.msra.mxu0 %v469
        %495 = vmatprep.subr.mxu0 0.0
        %496 = vmatpush1.msra.mxu0 %v470
        %497 = vmatprep.subr.mxu0 0.0
        %498 = vmatpush1.msra.mxu0 %v471
        %499 = vmatprep.subr.mxu0 0.0
        %500 = vmatpush1.msra.mxu0 %v472
        %501 = vmatprep.subr.mxu0 0.0
        %502 = vmatpush1.msra.mxu0 %v473
        %503 = vmatprep.subr.mxu0 0.0
        %504 = vmatpush1.msra.mxu0 0.0
        %505 = vmatprep.subr.mxu0 0.0
        %506 = vmatpush1.msra.mxu0 0.0
        %507 = vmatprep.subr.mxu0 0.0
        %508 = vmatpush1.msra.mxu0 0.0
        %509 = vmatprep.subr.mxu0 0.0
        %510 = vmatpush1.msra.mxu0 0.0
        %511 = vmatprep.subr.mxu0 0.0
        %512 = vmatpush1.msra.mxu0 0.0
        %513 = vmatprep.subr.mxu0 0.0
        %514 = vmatpush1.msra.mxu0 0.0
        %515 = vmatprep.subr.mxu0 0.0
        %516 = vmatpush1.msra.mxu0 0.0
        %517 = vmatprep.subr.mxu0 0.0
        %518 = vmatpush1.msra.mxu0 0.0
        %519 = vmatprep.subr.mxu0 0.0
        %520 = vmatpush1.msra.mxu0 0.0
        %521 = vmatprep.subr.mxu0 0.0
        %522 = vmatpush1.msra.mxu0 0.0
        %523 = vmatprep.subr.mxu0 0.0
        %524 = vmatpush1.msra.mxu0 0.0
        %525 = vmatprep.subr.mxu0 0.0
        %526 = vmatpush1.msra.mxu0 0.0
        %527 = vmatprep.subr.mxu0 0.0
        %528 = vmatpush1.msra.mxu0 0.0
        %529 = vmatprep.subr.mxu0 0.0
        %530 = vmatpush1.msra.mxu0 0.0
        %531 = vmatprep.subr.mxu0 0.0
        %532 = vmatpush1.msra.mxu0 0.0
        %533 = vmatprep.subr.mxu0 0.0
        %534 = vmatpush1.msra.mxu0 0.0
        %535 = vmatprep.subr.mxu0 0.0
        %536 = vmatpush1.msra.mxu0 0.0
        %537 = vmatprep.subr.mxu0 0.0
        %538 = vmatpush1.msra.mxu0 0.0
        %539 = vmatprep.subr.mxu0 0.0
        %540 = vmatpush1.msra.mxu0 0.0
        %541 = vmatprep.subr.mxu0 0.0
        %542 = vmatpush1.msra.mxu0 0.0
        %543 = vmatprep.subr.mxu0 0.0
        %544 = vmatpush1.msra.mxu0 0.0
        %545 = vmatprep.subr.mxu0 0.0
        %546 = vmatpush1.msra.mxu0 0.0
        %547 = vmatprep.subr.mxu0 0.0
        %548 = vmatpush1.msra.mxu0 0.0
        %549 = vmatprep.subr.mxu0 0.0
        %550 = vmatpush1.msra.mxu0 0.0
        %551 = vmatprep.mubr.f32.mxu0 0.0
        %552 = vmatmul.mubr.f32.gmra.mrb[0].mxu0 %v485
        %v553 = vpop.f32.mrb[0].mxu0
        %v554 = vadd.f32 0.0, %v553
        %v555 = vpop.f32.mrb[0].mxu0
        %556 = vdwg.mxu0
        %v557 = vadd.f32 %v482, %v554
        %558 = vst [vmem:[#allocation2] sm:$0x1] %v557
        // Predicated region
        $region57: #{_lambda_.1} parent=47 // pred_check
          %p559 = pneg %p326
        $region58: #{_lambda_.1} parent=47 // pred_check_branch
          %561 = sbr.rel (%p559) target = $region60
        $region59: #{_lambda_.1} parent=47 // pred_region
          %v562 = vld [vmem:[#allocation2] sm:$0x1]
          %v563 = vmul.f32 %v562, 0.015625
          %v564 = vpack.c.bf16 %v563, %v563
          %v565 = vld [vmem:[%s3] sm:$0xf]
          %v566 = vld [vmem:[%s3 + $0x4] sm:$0xf]
          %v567 = vld [vmem:[%s3 + $0x8] sm:$0xf]
          %v568 = vld [vmem:[%s3 + $0xc] sm:$0xf]
          %v569 = vld [vmem:[%s3 + $0x10] sm:$0xf]
          %v570 = vld [vmem:[%s3 + $0x14] sm:$0xf]
          %v571 = vld [vmem:[%s3 + $0x18] sm:$0xf]
          %v572 = vld [vmem:[%s3 + $0x1c] sm:$0xf]
          %v573 = vld [vmem:[%s3 + $0x20] sm:$0xf]
          %v574 = vld [vmem:[%s3 + $0x24] sm:$0xf]
          %v575 = vld [vmem:[%s3 + $0x28] sm:$0xf]
          %v576 = vld [vmem:[%s3 + $0x2c] sm:$0xf]
          %v577 = vld [vmem:[%s3 + $0x30] sm:$0xf]
          %v578 = vld [vmem:[%s3 + $0x34] sm:$0xf]
          %v579 = vld [vmem:[%s3 + $0x38] sm:$0xf]
          %v580 = vld [vmem:[%s3 + $0x3c] sm:$0xf]
          %v581 = vld [vmem:[#allocation3] sm:$0x1]
          %v582 = vld [vmem:[%s4] sm:$0x1]
          %v599 = vunpack.c.l.b16 %v565
          %v600 = vunpack.c.l.b16 %v566
          %v601 = vunpack.c.l.b16 %v567
          %v602 = vunpack.c.l.b16 %v568
          %v603 = vunpack.c.l.b16 %v569
          %v604 = vunpack.c.l.b16 %v570
          %v605 = vunpack.c.l.b16 %v571
          %v606 = vunpack.c.l.b16 %v572
          %v607 = vunpack.c.l.b16 %v573
          %v608 = vunpack.c.l.b16 %v574
          %v609 = vunpack.c.l.b16 %v575
          %v610 = vunpack.c.l.b16 %v576
          %v611 = vunpack.c.l.b16 %v577
          %v612 = vunpack.c.l.b16 %v578
          %v613 = vunpack.c.l.b16 %v579
          %v614 = vunpack.c.l.b16 %v580
          %v615 = vpack.c.b16 %v600, %v599
          %v616 = vpack.c.b16 %v602, %v601
          %v617 = vpack.c.b16 %v604, %v603
          %v618 = vpack.c.b16 %v606, %v605
          %v619 = vpack.c.b16 %v608, %v607
          %v620 = vpack.c.b16 %v610, %v609
          %v621 = vpack.c.b16 %v612, %v611
          %v622 = vpack.c.b16 %v614, %v613
          %631 = vmatprep.subr.bf16.mxu0 0
          %632 = vmatpush1.bf16.msra.mxu0 %v615
          %633 = vmatprep.subr.bf16.mxu0 0
          %634 = vmatpush1.bf16.msra.mxu0 %v616
          %635 = vmatprep.subr.bf16.mxu0 0
          %636 = vmatpush1.bf16.msra.mxu0 %v617
          %637 = vmatprep.subr.bf16.mxu0 0
          %638 = vmatpush1.bf16.msra.mxu0 %v618
          %639 = vmatprep.subr.bf16.mxu0 0
          %640 = vmatpush1.bf16.msra.mxu0 %v619
          %641 = vmatprep.subr.bf16.mxu0 0
          %642 = vmatpush1.bf16.msra.mxu0 %v620
          %643 = vmatprep.subr.bf16.mxu0 0
          %644 = vmatpush1.bf16.msra.mxu0 %v621
          %645 = vmatprep.subr.bf16.mxu0 0
          %646 = vmatpush1.bf16.msra.mxu0 %v622
          %647 = vmatprep.subr.bf16.mxu0 0
          %648 = vmatpush1.bf16.msra.mxu0 0
          %649 = vmatprep.subr.bf16.mxu0 0
          %650 = vmatpush1.bf16.msra.mxu0 0
          %651 = vmatprep.subr.bf16.mxu0 0
          %652 = vmatpush1.bf16.msra.mxu0 0
          %653 = vmatprep.subr.bf16.mxu0 0
          %654 = vmatpush1.bf16.msra.mxu0 0
          %655 = vmatprep.subr.bf16.mxu0 0
          %656 = vmatpush1.bf16.msra.mxu0 0
          %657 = vmatprep.subr.bf16.mxu0 0
          %658 = vmatpush1.bf16.msra.mxu0 0
          %659 = vmatprep.subr.bf16.mxu0 0
          %660 = vmatpush1.bf16.msra.mxu0 0
          %661 = vmatprep.subr.bf16.mxu0 0
          %662 = vmatpush1.bf16.msra.mxu0 0
          %663 = vmatprep.mubr.bf16.mxu0 0
          %664 = vmatmul.mubr.bf16.gmra.mrb[0].mxu0 %v564
          %v665 = vpop.f32.mrb[0].mxu0
          %v666 = vadd.f32 %v582, %v665
          %v667 = vpop.f32.mrb[0].mxu0
          %v668 = vpop.f32.mrb[0].mxu0
          %v669 = vpop.f32.mrb[0].mxu0
          %670 = vdwg.mxu0
          %v671 = vmax.f32 %v666, 0.0
          %v672 = vadd.f32 %v581, %v671
          %673 = vst [vmem:[#allocation3] sm:$0x1] %v672
        $region60: #{_lambda_.1} parent=47 // pred_fallthru
          _
        %p674 = scmp.eq.s32.totalorder %s27, 3
        %p675 = pnand %p326, %p674
        %p676 = pneg %p675
        // Predicated region
        $region61: #{_lambda_.1} parent=47 // pred_check
          _
        $region62: #{_lambda_.1} parent=47 // pred_check_branch
          %678 = sbr.rel (%p675) target = $region64
        $region63: #{_lambda_.1} parent=47 // pred_region
          %v679 = vld [vmem:[#allocation3] sm:$0x1]
          %v680 = vmul.f32 %v679, 0.25
          %v681 = vpack.c.bf16 %v680, %v680
          %v682 = vld [vmem:[%s5] sm:$0xf]
          %v683 = vld [vmem:[%s5 + $0x4] sm:$0xf]
          %v684 = vld [vmem:[%s5 + $0x8] sm:$0xf]
          %v685 = vld [vmem:[%s5 + $0xc] sm:$0xf]
          %v686 = vld [vmem:[%s5 + $0x10] sm:$0xf]
          %v687 = vld [vmem:[%s5 + $0x14] sm:$0xf]
          %v688 = vld [vmem:[%s5 + $0x18] sm:$0xf]
          %v689 = vld [vmem:[%s5 + $0x1c] sm:$0xf]
          %v690 = vld [vmem:[%s5 + $0x20] sm:$0xf]
          %v691 = vld [vmem:[%s5 + $0x24] sm:$0xf]
          %v692 = vld [vmem:[%s5 + $0x28] sm:$0xf]
          %v693 = vld [vmem:[%s5 + $0x2c] sm:$0xf]
          %v694 = vld [vmem:[%s5 + $0x30] sm:$0xf]
          %v695 = vld [vmem:[%s5 + $0x34] sm:$0xf]
          %v696 = vld [vmem:[%s5 + $0x38] sm:$0xf]
          %v697 = vld [vmem:[%s5 + $0x3c] sm:$0xf]
          %v698 = vld [vmem:[%s6] sm:$0x1]
          %v715 = vunpack.c.l.b16 %v682
          %v716 = vunpack.c.l.b16 %v683
          %v717 = vunpack.c.l.b16 %v684
          %v718 = vunpack.c.l.b16 %v685
          %v719 = vunpack.c.l.b16 %v686
          %v720 = vunpack.c.l.b16 %v687
          %v721 = vunpack.c.l.b16 %v688
          %v722 = vunpack.c.l.b16 %v689
          %v723 = vunpack.c.l.b16 %v690
          %v724 = vunpack.c.l.b16 %v691
          %v725 = vunpack.c.l.b16 %v692
          %v726 = vunpack.c.l.b16 %v693
          %v727 = vunpack.c.l.b16 %v694
          %v728 = vunpack.c.l.b16 %v695
          %v729 = vunpack.c.l.b16 %v696
          %v730 = vunpack.c.l.b16 %v697
          %v731 = vpack.c.b16 %v716, %v715
          %v732 = vpack.c.b16 %v718, %v717
          %v733 = vpack.c.b16 %v720, %v719
          %v734 = vpack.c.b16 %v722, %v721
          %v735 = vpack.c.b16 %v724, %v723
          %v736 = vpack.c.b16 %v726, %v725
          %v737 = vpack.c.b16 %v728, %v727
          %v738 = vpack.c.b16 %v730, %v729
          %747 = vmatprep.subr.bf16.mxu0 0
          %748 = vmatpush1.bf16.msra.mxu0 %v731
          %749 = vmatprep.subr.bf16.mxu0 0
          %750 = vmatpush1.bf16.msra.mxu0 %v732
          %751 = vmatprep.subr.bf16.mxu0 0
          %752 = vmatpush1.bf16.msra.mxu0 %v733
          %753 = vmatprep.subr.bf16.mxu0 0
          %754 = vmatpush1.bf16.msra.mxu0 %v734
          %755 = vmatprep.subr.bf16.mxu0 0
          %756 = vmatpush1.bf16.msra.mxu0 %v735
          %757 = vmatprep.subr.bf16.mxu0 0
          %758 = vmatpush1.bf16.msra.mxu0 %v736
          %759 = vmatprep.subr.bf16.mxu0 0
          %760 = vmatpush1.bf16.msra.mxu0 %v737
          %761 = vmatprep.subr.bf16.mxu0 0
          %762 = vmatpush1.bf16.msra.mxu0 %v738
          %763 = vmatprep.subr.bf16.mxu0 0
          %764 = vmatpush1.bf16.msra.mxu0 0
          %765 = vmatprep.subr.bf16.mxu0 0
          %766 = vmatpush1.bf16.msra.mxu0 0
          %767 = vmatprep.subr.bf16.mxu0 0
          %768 = vmatpush1.bf16.msra.mxu0 0
          %769 = vmatprep.subr.bf16.mxu0 0
          %770 = vmatpush1.bf16.msra.mxu0 0
          %771 = vmatprep.subr.bf16.mxu0 0
          %772 = vmatpush1.bf16.msra.mxu0 0
          %773 = vmatprep.subr.bf16.mxu0 0
          %774 = vmatpush1.bf16.msra.mxu0 0
          %775 = vmatprep.subr.bf16.mxu0 0
          %776 = vmatpush1.bf16.msra.mxu0 0
          %777 = vmatprep.subr.bf16.mxu0 0
          %778 = vmatpush1.bf16.msra.mxu0 0
          %779 = vmatprep.mubr.bf16.mxu0 0
          %780 = vmatmul.mubr.bf16.gmra.mrb[0].mxu0 %v681
          %v781 = vpop.f32.mrb[0].mxu0
          %v782 = vadd.f32 %v698, %v781
          %v783 = vpop.f32.mrb[0].mxu0
          %v784 = vpop.f32.mrb[0].mxu0
          %v785 = vpop.f32.mrb[0].mxu0
          %786 = vdwg.mxu0
          %787 = vst [vmem:[%s310] sm:$0x1] %v782
        $region64: #{_lambda_.1} parent=47 // pred_fallthru
          _
        %s788 = sand.u32 %s204, 1
        %s789 = scalar_lea.sflag [#allocation5], %s788
        %s790 = sand.u32 %s204, 1
        %s791 = scalar_lea.vmem [#allocation4], %s790
        // Predicated region
        $region65: #{_lambda_.1} parent=47 // pred_check
          %p792 = pneg %p214
        $region66: #{_lambda_.1} parent=47 // pred_check_branch
          %794 = sbr.rel (%p792) target = $region68
        $region67: #{_lambda_.1} parent=47 // pred_region
          %s796 = ssub.s32 16, 16
          %797 = vsyncadd %s789, %s796
          %s798 = smul.addr %s26, 16
          %s799 = scalar_lea.hbm %s7, %s798
          %s801 = sshll.u32 %s791, 4
          %s802 = int_to_ptr.vmem [resolvable:$true] %s801
          %804 = dma.vmem_to_hbm [thread:$0]  %s802, 16, %s799, %s789
        $region68: #{_lambda_.1} parent=47 // pred_fallthru
          _
      $region48: #{_lambda_.1} parent=5 // pred_fallthru
        _
      %p805 = scmp.le.s32.totalorder 2, %s16
      // Predicated region
      $region69: #{_lambda_.1} parent=5 // pred_check
        %p806 = pneg %p805
      $region70: #{_lambda_.1} parent=5 // pred_check_branch
        %808 = sbr.rel (%p806) target = $region72
      $region71: #{_lambda_.1} parent=5 // pred_region
        %s809 = ssub.s32 %s16, 2
        // Predicated region
        $region73: #{_lambda_.1} parent=71 // pred_check
          %p810 = pneg %p220
        $region74: #{_lambda_.1} parent=71 // pred_check_branch
          %812 = sbr.rel (%p810) target = $region76
        $region75: #{_lambda_.1} parent=71 // pred_region
          %s813 = sand.u32 %s205, 1
          %s814 = scalar_lea.sflag [#allocation5], %s813
          %s815 = sand.u32 %s205, 1
          %s816 = scalar_lea.vmem [#allocation4], %s815
          %817 = dma.done %s814, 16
        $region76: #{_lambda_.1} parent=71 // pred_fallthru
          _
      $region72: #{_lambda_.1} parent=5 // pred_fallthru
        _
    $region6: #{_lambda_.1} parent=1 // loop_footer
      %s20 = sadd.s32 1, %s16
    $region7: #{_lambda_.1} parent=1 // loop_footer_branch
      %15 = sbr.rel target = $region3
    $region8: #{_lambda_.1} parent=1 // loop_exit
      _
    %818 = vsyncpa [#allocation5], 1
    %s819 = scalar_lea.sflag [#allocation5], 1
    %820 = vsyncpa %s819, 1

</llo_original>
